<compile_context>
chip_gen: v5e
topology: v5e:2x2
jax: 0.10.0
libtpu: 0.0.40
codegen_flags: <defaults>
</compile_context>

<pallas_src>
import jax
import jax.numpy as jnp
from jax import lax
from jax.experimental import pallas as pl
from jax.experimental.pallas import tpu as pltpu

_SQRT_2_OVER_PI = 0.7978845608028654


def _gelu_tanh(h):
    # tanh-approx GELU, matches torch.nn.GELU(approximate='tanh'); done in f32.
    return 0.5 * h * (1.0 + jnp.tanh(_SQRT_2_OVER_PI * (h + 0.044715 * h * h * h)))


# --------------------------------------------------------------------------
# Kernels
# --------------------------------------------------------------------------
def _make_resident_kernel(chunk_h, n_chunks):
    """Weights fully VMEM-resident; grid iterates over M tiles only."""
    def kernel(x_ref, wfc_ref, wproj_ref, o_ref):
        # x_ref:     (TILE_M, C)   activations (compute dtype)
        # wfc_ref:   (C, H)        W_fc^T, resident (constant block index)
        # wproj_ref: (H, C)        W_proj^T, resident
        # o_ref:     (TILE_M, C)
        x = x_ref[...]
        acc = None
        for kk in range(n_chunks):          # static unroll over H chunks
            lo = kk * chunk_h
            h = jnp.dot(x, wfc_ref[:, lo:lo + chunk_h],
                        preferred_element_type=jnp.float32)
            g = _gelu_tanh(h)
            part = jnp.dot(g.astype(x.dtype), wproj_ref[lo:lo + chunk_h, :],
                           preferred_element_type=jnp.float32)
            acc = part if acc is None else acc + part
        o_ref[...] = acc.astype(o_ref.dtype)
    return kernel


def _blocked_kernel(x_ref, wfc_ref, wproj_ref, o_ref, acc_ref):
    """Fallback for very large C: H is a grid reduction axis, f32 accumulator."""
    k = pl.program_id(1)

    @pl.when(k == 0)
    def _():
        acc_ref[...] = jnp.zeros_like(acc_ref)

    x = x_ref[...]
    # Both dots contract the RHS sublane dim (MXU-native) thanks to the
    # one-time host-side transpose of the weights.
    h = jnp.dot(x, wfc_ref[...], preferred_element_type=jnp.float32)  # (tm, th)
    g = _gelu_tanh(h)
    acc_ref[...] += jnp.dot(g.astype(x.dtype), wproj_ref[...],
                            preferred_element_type=jnp.float32)        # (tm, C)

    @pl.when(k == pl.num_programs(1) - 1)
    def _():
        o_ref[...] = acc_ref[...].astype(o_ref.dtype)


# --------------------------------------------------------------------------
# Wrapper / planning
# --------------------------------------------------------------------------
def _vmem_budget_bytes():
    cap = 64 * 1024 * 1024                       # safe default (v7x per-core VMEM)
    try:
        cap = int(pltpu.get_tpu_info().vmem_capacity_bytes)
    except Exception:
        pass
    # Use ~75% of per-core VMEM, clamped to a sane cross-generation range.
    return max(32 * 1024 * 1024, min(int(cap * 0.75), 100 * 1024 * 1024))


def _choose_tile_m(M, candidates, fits):
    # Largest tile that fits VMEM and still leaves >= 2 M-tiles (so the
    # "parallel" M axis can span both TensorCores on v7x); fall back to 8.
    for t in candidates:
        if (2 * t <= M or t == 8) and fits(t):
            return t
    return 8


def mlp_pallas(x, w_fc, w_proj):
    """y = gelu_tanh(x @ w_fc^T) @ w_proj^T.

    x: (B, T, C); w_fc: (4C, C); w_proj: (C, 4C) in PyTorch (out, in) layout.
    For v5e production shapes pass bf16 x / weights (no fast f32 MXU path).
    """
    B, T, C = x.shape
    H = w_fc.shape[0]
    assert w_fc.shape == (H, C) and w_proj.shape == (C, H)

    dtype = x.dtype
    s = jnp.dtype(dtype).itemsize
    budget = _vmem_budget_bytes()

    # One-time layout change to the MXU-native RHS orientation.
    wfc_t = w_fc.T.astype(dtype)        # (C, H)
    wproj_t = w_proj.T.astype(dtype)    # (H, C)

    M = B * T
    x2d = x.reshape(M, C)

    weight_bytes = 2 * C * H * s        # both (transposed) weights, one copy

    if 2 * weight_bytes <= int(budget * 0.55):
        # ---------------- resident-weights path ----------------
        # In-kernel H chunk bounds the (tile_m, chunk_h) f32 intermediate;
        # multiples of 128 keep the lane-dim slices aligned.
        chunk_h = H
        if H > 1024:
            for ch in (1024, 512, 256, 128):
                if H % ch == 0:
                    chunk_h = ch
                    break
        n_chunks = H // chunk_h

        avail = budget - 2 * weight_bytes      # weights may be double-buffered

        def fits(t):
            per_tile = (4 * t * C * s              # x + out blocks, double-buffered
                        + 4 * t * C                # f32 accumulator value
                        + t * chunk_h * (4 + s))   # f32 h + cast g intermediate
            return per_tile <= avail

        tile_m = _choose_tile_m(M, (512, 256, 128, 64, 32, 16, 8), fits)
        num_m = pl.cdiv(M, tile_m)
        M_pad = num_m * tile_m
        if M_pad != M:
            x2d = jnp.pad(x2d, ((0, M_pad - M), (0, 0)))

        out2d = pl.pallas_call(
            _make_resident_kernel(chunk_h, n_chunks),
            out_shape=jax.ShapeDtypeStruct((M_pad, C), dtype),
            grid_spec=pltpu.PrefetchScalarGridSpec(
                num_scalar_prefetch=0,
                grid=(num_m,),
                in_specs=[
                    pl.BlockSpec((tile_m, C), lambda i: (i, 0)),
                    # Constant block index -> DMA'd from HBM once, then held
                    # resident in VMEM across all M tiles.
                    pl.BlockSpec((C, H), lambda i: (0, 0)),
                    pl.BlockSpec((H, C), lambda i: (0, 0)),
                ],
                out_specs=pl.BlockSpec((tile_m, C), lambda i: (i, 0)),
            ),
            compiler_params=pltpu.CompilerParams(
                dimension_semantics=("parallel",),
                vmem_limit_bytes=budget),
            cost_estimate=pl.CostEstimate(
                flops=4 * M_pad * C * H,
                transcendentals=M_pad * H,
                bytes_accessed=(2 * M_pad * C + 2 * H * C) * s),
        )(x2d, wfc_t, wproj_t)
    else:
        # ---------------- blocked fallback (very large C) ----------------
        tile_h = H
        for th in (2048, 1024, 512, 256, 128):
            # double-buffered W_fc^T + W_proj^T blocks must leave headroom
            if H % th == 0 and 4 * C * th * s <= int(budget * 0.4):
                tile_h = th
                break

        def fits(t):
            per_tile = (4 * t * C * s              # x + out, double-buffered
                        + 4 * t * C                # f32 accumulator scratch
                        + 4 * C * tile_h * s       # weight blocks, double-buffered
                        + t * tile_h * (4 + s))    # f32 h + cast g
            return per_tile <= int(budget * 0.85)

        tile_m = _choose_tile_m(M, (1024, 512, 256, 128, 64, 32, 16, 8), fits)
        num_m = pl.cdiv(M, tile_m)
        M_pad = num_m * tile_m
        if M_pad != M:
            x2d = jnp.pad(x2d, ((0, M_pad - M), (0, 0)))

        out2d = pl.pallas_call(
            _blocked_kernel,
            out_shape=jax.ShapeDtypeStruct((M_pad, C), dtype),
            grid_spec=pltpu.PrefetchScalarGridSpec(
                num_scalar_prefetch=0,
                grid=(num_m, H // tile_h),             # reduction axis last
                in_specs=[
                    pl.BlockSpec((tile_m, C), lambda i, k: (i, 0)),
                    pl.BlockSpec((C, tile_h), lambda i, k: (0, k)),
                    pl.BlockSpec((tile_h, C), lambda i, k: (k, 0)),
                ],
                out_specs=pl.BlockSpec((tile_m, C), lambda i, k: (i, 0)),
                scratch_shapes=[pltpu.VMEM((tile_m, C), jnp.float32)],
            ),
            compiler_params=pltpu.CompilerParams(
                dimension_semantics=("parallel", "arbitrary"),
                vmem_limit_bytes=budget),
            cost_estimate=pl.CostEstimate(
                flops=4 * M_pad * C * H,
                transcendentals=M_pad * H,
                # weights are re-streamed once per M tile on this path
                bytes_accessed=(2 * M_pad * C + num_m * 2 * H * C) * s),
        )(x2d, wfc_t, wproj_t)

    return out2d[:M].reshape(B, T, C)


def _reference(x, w_fc, w_proj):
    h = x @ w_fc.T
    g = 0.5 * h * (1.0 + jnp.tanh(_SQRT_2_OVER_PI * (h + 0.044715 * h ** 3)))
    return g @ w_proj.T


if __name__ == "__main__":
    # Small config: batch=2, seq=8, n_embd=32 -> hidden = 128
    B, T, C = 2, 8, 32
    H = 4 * C

    key = jax.random.PRNGKey(0)
    kx, kfc, kproj = jax.random.split(key, 3)

    x = jax.random.normal(kx, (B, T, C), dtype=jnp.float32)
    # PyTorch (out, in) weight layout, exactly as nn.Linear stores them.
    w_fc = jax.random.normal(kfc, (H, C), dtype=jnp.float32) * 0.02
    w_proj = jax.random.normal(kproj, (C, H), dtype=jnp.float32) * 0.02

    y = mlp_pallas(x, w_fc, w_proj)
    jax.block_until_ready(y)

    y_ref = _reference(x, w_fc, w_proj)
    assert jnp.allclose(y, y_ref, atol=1e-5, rtol=1e-5), "mismatch vs reference"

    print("KERNEL_OK")
</pallas_src>

<mosaic_0001>
module attributes {stable_mosaic.version = 11 : i64} {
  func.func @kernel(%arg0: i32, %arg1: memref<8x32xf32, #tpu.memory_space<vmem>>, %arg2: memref<32x128xf32, #tpu.memory_space<vmem>>, %arg3: memref<128x32xf32, #tpu.memory_space<vmem>>, %arg4: memref<8x32xf32, #tpu.memory_space<vmem>>) attributes {dimension_semantics = [#tpu.dimension_semantics<parallel>], iteration_bounds = array<i64: 2>, scalar_prefetch = 0 : i64, scratch_operands = 0 : i64, tpu.core_type = #tpu.core_type<tc>, window_params = [{transform_indices = @transform_0, window_bounds = array<i64: 8, 32>}, {pipeline_mode = #tpu.pipeline_mode<synchronous>, transform_indices = @transform_1, window_bounds = array<i64: 32, 128>}, {pipeline_mode = #tpu.pipeline_mode<synchronous>, transform_indices = @transform_2, window_bounds = array<i64: 128, 32>}, {transform_indices = @transform_3, window_bounds = array<i64: 8, 32>}]} {
    %c0 = arith.constant 0 : index
    %c0_0 = arith.constant 0 : index
    %0 = vector.load %arg1[%c0, %c0_0] : memref<8x32xf32, #tpu.memory_space<vmem>>, vector<8x32xf32>
    %c0_1 = arith.constant 0 : index
    %c0_2 = arith.constant 0 : index
    %1 = vector.load %arg2[%c0_1, %c0_2] : memref<32x128xf32, #tpu.memory_space<vmem>>, vector<32x128xf32>
    %cst = arith.constant dense<0.000000e+00> : vector<8x128xf32>
    %2 = tpu.matmul %0, %1, %cst {dimension_numbers = #tpu.dot_dimension_numbers<[1], [0], [0], [1], [0, 0, 1, 1], [], []>} : vector<8x32xf32>, vector<32x128xf32>, vector<8x128xf32> -> vector<8x128xf32>
    %cst_3 = arith.constant 5.000000e-01 : f32
    %3 = vector.broadcast %cst_3 : f32 to vector<8x128xf32>
    %4 = arith.mulf %3, %2 : vector<8x128xf32>
    %cst_4 = arith.constant 4.471500e-02 : f32
    %5 = vector.broadcast %cst_4 : f32 to vector<8x128xf32>
    %6 = arith.mulf %5, %2 : vector<8x128xf32>
    %7 = arith.mulf %6, %2 : vector<8x128xf32>
    %8 = arith.mulf %7, %2 : vector<8x128xf32>
    %9 = arith.addf %2, %8 : vector<8x128xf32>
    %cst_5 = arith.constant 0.797884583 : f32
    %10 = vector.broadcast %cst_5 : f32 to vector<8x128xf32>
    %11 = arith.mulf %10, %9 : vector<8x128xf32>
    %12 = math.tanh %11 : vector<8x128xf32>
    %cst_6 = arith.constant 1.000000e+00 : f32
    %13 = vector.broadcast %cst_6 : f32 to vector<8x128xf32>
    %14 = arith.addf %13, %12 : vector<8x128xf32>
    %15 = arith.mulf %4, %14 : vector<8x128xf32>
    %c0_7 = arith.constant 0 : index
    %c0_8 = arith.constant 0 : index
    %16 = vector.load %arg3[%c0_7, %c0_8] : memref<128x32xf32, #tpu.memory_space<vmem>>, vector<128x32xf32>
    %cst_9 = arith.constant dense<0.000000e+00> : vector<8x32xf32>
    %17 = tpu.matmul %15, %16, %cst_9 {dimension_numbers = #tpu.dot_dimension_numbers<[1], [0], [0], [1], [0, 0, 1, 1], [], []>} : vector<8x128xf32>, vector<128x32xf32>, vector<8x32xf32> -> vector<8x32xf32>
    %c0_10 = arith.constant 0 : index
    %c0_11 = arith.constant 0 : index
    %18 = vector.load %arg4[%c0_10, %c0_11] : memref<8x32xf32, #tpu.memory_space<vmem>>, vector<8x32xf32>
    tpu.vector_store %arg4[%c0_10, %c0_11], %17 {strides = array<i32>} : memref<8x32xf32, #tpu.memory_space<vmem>>, vector<8x32xf32>,
    return
  }
  func.func @transform_0(%arg0: i32) -> (i32, i32) {
    %c0_i32 = arith.constant 0 : i32
    %c0_i32_0 = arith.constant 0 : i32
    return %arg0, %c0_i32 : i32, i32
  }
  func.func @transform_1(%arg0: i32) -> (i32, i32) {
    %c0_i32 = arith.constant 0 : i32
    %c0_i32_0 = arith.constant 0 : i32
    %c0_i32_1 = arith.constant 0 : i32
    return %c0_i32, %c0_i32_0 : i32, i32
  }
  func.func @transform_2(%arg0: i32) -> (i32, i32) {
    %c0_i32 = arith.constant 0 : i32
    %c0_i32_0 = arith.constant 0 : i32
    %c0_i32_1 = arith.constant 0 : i32
    return %c0_i32, %c0_i32_0 : i32, i32
  }
  func.func @transform_3(%arg0: i32) -> (i32, i32) {
    %c0_i32 = arith.constant 0 : i32
    %c0_i32_0 = arith.constant 0 : i32
    return %arg0, %c0_i32 : i32, i32
  }
}

</mosaic_0001>

<llo_original>
// kernel: tpu_custom_call.1
$region0: #{tpu_custom_call.1}
  #allocation0 [shape = 'u32[]', space=smem, size = 0x4, offset = 0x4, fixed_abs, tag = 'smem constant byte address 0x4 - core index']
  #allocation1 [shape = 'u32[72,128]{1,0:T(1,128)}', space=vmem, size = 0x9000, scoped, tag = 'internal scratch']
  %s0 = inlined_call_operand.vmem [shape: f32[16,32], index: 0, kind: input, shape index: {}]
  %s1 = inlined_call_operand.vmem [shape: f32[32,128], index: 1, kind: input, shape index: {}]
  %s2 = inlined_call_operand.vmem [shape: f32[128,32], index: 2, kind: input, shape index: {}]
  %s3 = inlined_call_operand.hbm [shape: f32[16,32], index: 3, kind: output, shape index: {}]
  %s4 = sld [smem:[#allocation0]]
  $region45: #{tpu_custom_call.1} parent=0
    _
  %s6 = ssub.s32 1, %s4
  %s7 = scalar_select 0, %s6, %s4
  $region1: #{tpu_custom_call.1} parent=0
    #allocation2 [shape = 'u8[8192]{0}', space=vmem, size = 0x2000, scoped, tag = 'output window, operand 0']
    #allocation3 [shape = 's32[2]{0}', space=sflag, size = 0x8, scoped, tag = 'scoped memory for tpu_custom_call.1']
    %8 = vsyncpa [#allocation3], 0
    %s9 = scalar_lea.sflag [#allocation3], 1
    %10 = vsyncpa %s9, 0
    loop: start=0, step=1, limit=4
    $region2: #{tpu_custom_call.1} parent=1 // loop_pre_header
      _
    $region3: #{tpu_custom_call.1} parent=1 // loop_header
      %s12 = sphi 0, %s16
      %p13 = scmp.ge.s32.totalorder %s12, 4
      %s22 = sphi 0, %s24
      %s25 = sphi 0, %s22
      %s26 = sphi 0, %s25
      %s42 = sphi 0, %s26
      %s46 = sphi 0, %s46
      %s48 = sphi 0, %s46
      %s49 = sphi 0, %s48
      %s63 = sphi 0, %s49
      %s67 = sphi 0, %s67
      %s69 = sphi 0, %s67
      %s70 = sphi 0, %s69
      %s84 = sphi 0, %s70
      %s90 = sphi 0, %s92
      %s93 = sphi 0, %s90
      %s94 = sphi 0, %s93
      %s110 = sphi 0, %s94
    $region4: #{tpu_custom_call.1} parent=1 // loop_header_branch
      %15 = sbr.rel (%p13) target = $region8
    $region5: #{tpu_custom_call.1} parent=1 // loop_body
      %s17 = ssub.s32 %s12, 1
      %s18 = ssub.s32 %s12, 2
      %s19 = sadd.s32 %s12, 1
      %s20 = ssub.s32 %s12, %s19
      %p21 = scmp.eq.s32.totalorder %s20, 0
      %s23 = sadd.s32 %s22, 1
      %s24 = scalar_select %p21, %s22, %s23
      %p27 = pneg %p21
      %p28 = scmp.eq.s32.totalorder %s12, 1
      %p29 = por %p27, %p28
      %p30 = scmp.ne.s32.totalorder %s22, %s25
      %p31 = scmp.eq.s32.totalorder %s12, 0
      %p32 = por %p30, %p31
      %p33 = scmp.ne.s32.totalorder %s22, %s25
      %p34 = scmp.eq.s32.totalorder %s17, 1
      %p35 = por %p33, %p34
      %p36 = scmp.ne.s32.totalorder %s25, %s26
      %p37 = scmp.eq.s32.totalorder %s17, 0
      %p38 = por %p36, %p37
      %p39 = scmp.ne.s32.totalorder %s25, %s26
      %p40 = scmp.eq.s32.totalorder %s18, 1
      %p41 = por %p39, %p40
      %p43 = scmp.ne.s32.totalorder %s26, %s42
      %p44 = scmp.eq.s32.totalorder %s18, 0
      %p45 = por %p43, %p44
      %s47 = sadd.s32 %s46, 1
      %p50 = scmp.eq.s32.totalorder %s12, 1
      %p51 = scmp.ne.s32.totalorder %s46, %s48
      %p52 = scmp.eq.s32.totalorder %s12, 0
      %p53 = por %p51, %p52
      %p54 = scmp.ne.s32.totalorder %s46, %s48
      %p55 = scmp.eq.s32.totalorder %s17, 1
      %p56 = por %p54, %p55
      %p57 = scmp.ne.s32.totalorder %s48, %s49
      %p58 = scmp.eq.s32.totalorder %s17, 0
      %p59 = por %p57, %p58
      %p60 = scmp.ne.s32.totalorder %s48, %s49
      %p61 = scmp.eq.s32.totalorder %s18, 1
      %p62 = por %p60, %p61
      %p64 = scmp.ne.s32.totalorder %s49, %s63
      %p65 = scmp.eq.s32.totalorder %s18, 0
      %p66 = por %p64, %p65
      %s68 = sadd.s32 %s67, 1
      %p71 = scmp.eq.s32.totalorder %s12, 1
      %p72 = scmp.ne.s32.totalorder %s67, %s69
      %p73 = scmp.eq.s32.totalorder %s12, 0
      %p74 = por %p72, %p73
      %p75 = scmp.ne.s32.totalorder %s67, %s69
      %p76 = scmp.eq.s32.totalorder %s17, 1
      %p77 = por %p75, %p76
      %p78 = scmp.ne.s32.totalorder %s69, %s70
      %p79 = scmp.eq.s32.totalorder %s17, 0
      %p80 = por %p78, %p79
      %p81 = scmp.ne.s32.totalorder %s69, %s70
      %p82 = scmp.eq.s32.totalorder %s18, 1
      %p83 = por %p81, %p82
      %p85 = scmp.ne.s32.totalorder %s70, %s84
      %p86 = scmp.eq.s32.totalorder %s18, 0
      %p87 = por %p85, %p86
      %s88 = ssub.s32 %s12, %s19
      %p89 = scmp.eq.s32.totalorder %s88, 0
      %s91 = sadd.s32 %s90, 1
      %s92 = scalar_select %p89, %s90, %s91
      %p95 = pneg %p89
      %p96 = scmp.eq.s32.totalorder %s12, 1
      %p97 = por %p95, %p96
      %p98 = scmp.ne.s32.totalorder %s90, %s93
      %p99 = scmp.eq.s32.totalorder %s12, 0
      %p100 = por %p98, %p99
      %p101 = scmp.ne.s32.totalorder %s90, %s93
      %p102 = scmp.eq.s32.totalorder %s17, 1
      %p103 = por %p101, %p102
      %p104 = scmp.ne.s32.totalorder %s93, %s94
      %p105 = scmp.eq.s32.totalorder %s17, 0
      %p106 = por %p104, %p105
      %p107 = scmp.ne.s32.totalorder %s93, %s94
      %p108 = scmp.eq.s32.totalorder %s18, 1
      %p109 = por %p107, %p108
      %p111 = scmp.ne.s32.totalorder %s94, %s110
      %p112 = scmp.eq.s32.totalorder %s18, 0
      %p113 = por %p111, %p112
      %p114 = scmp.le.s32.totalorder 1, %s12
      %p115 = scmp.lt.s32.totalorder %s12, 3
      %p116 = pnand %p114, %p115
      %p117 = pneg %p116
      // Predicated region
      $region9: #{tpu_custom_call.1} parent=5 // pred_check
        _
      $region10: #{tpu_custom_call.1} parent=5 // pred_check_branch
        %119 = sbr.rel (%p116) target = $region12
      $region11: #{tpu_custom_call.1} parent=5 // pred_region
        %s120 = ssub.s32 %s12, 1
        // Predicated region
        $region13: #{tpu_custom_call.1} parent=11 // pred_check
          %p121 = pneg %p59
        $region14: #{tpu_custom_call.1} parent=11 // pred_check_branch
          %123 = sbr.rel (%p121) target = $region16
        $region15: #{tpu_custom_call.1} parent=11 // pred_region
          _
        $region16: #{tpu_custom_call.1} parent=11 // pred_fallthru
          _
        // Predicated region
        $region17: #{tpu_custom_call.1} parent=11 // pred_check
          %p124 = pneg %p80
        $region18: #{tpu_custom_call.1} parent=11 // pred_check_branch
          %126 = sbr.rel (%p124) target = $region20
        $region19: #{tpu_custom_call.1} parent=11 // pred_region
          _
        $region20: #{tpu_custom_call.1} parent=11 // pred_fallthru
          _
      $region12: #{tpu_custom_call.1} parent=5 // pred_fallthru
        _
      %p127 = scmp.lt.s32.totalorder %s12, 2
      // Predicated region
      $region21: #{tpu_custom_call.1} parent=5 // pred_check
        %p128 = pneg %p127
      $region22: #{tpu_custom_call.1} parent=5 // pred_check_branch
        %130 = sbr.rel (%p128) target = $region24
      $region23: #{tpu_custom_call.1} parent=5 // pred_region
        // Predicated region
        $region25: #{tpu_custom_call.1} parent=23 // pred_check
          %p131 = pneg %p32
        $region26: #{tpu_custom_call.1} parent=23 // pred_check_branch
          %133 = sbr.rel (%p131) target = $region28
        $region27: #{tpu_custom_call.1} parent=23 // pred_region
          %p134 = scmp.lt.s32.totalorder %s12, 1
          %s135 = scalar_select %p134, %s12, 1
          %s136 = smul.addr %s135, 8
          %s137 = scalar_lea.vmem %s0, %s136
        $region28: #{tpu_custom_call.1} parent=23 // pred_fallthru
          _
      $region24: #{tpu_custom_call.1} parent=5 // pred_fallthru
        _
      %p138 = scmp.le.s32.totalorder 1, %s12
      %p139 = scmp.lt.s32.totalorder %s12, 3
      %p140 = pnand %p138, %p139
      %p141 = pneg %p140
      // Predicated region
      $region29: #{tpu_custom_call.1} parent=5 // pred_check
        _
      $region30: #{tpu_custom_call.1} parent=5 // pred_check_branch
        %143 = sbr.rel (%p140) target = $region32
      $region31: #{tpu_custom_call.1} parent=5 // pred_region
        %s144 = ssub.s32 %s12, 1
        %p145 = scmp.lt.s32.totalorder %s17, 1
        %s146 = scalar_select %p145, %s17, 1
        %s147 = smul.addr %s146, 8
        %s148 = scalar_lea.vmem %s0, %s147
        %p149 = pneg %p38
        %p150 = pneg %p35
        %p151 = pneg %p59
        %p152 = pneg %p56
        %p153 = pneg %p80
        %p154 = pneg %p77
        %p155 = pneg %p106
        %p156 = pneg %p103
        %s157 = sand.u32 %s93, 1
        %s158 = scalar_lea.sflag [#allocation3], %s157
        %s159 = sand.u32 %s93, 1
        %s160 = smul.addr %s159, 8
        %s161 = scalar_lea.vmem [#allocation2], %s160
        %p162 = scmp.lt.s32.totalorder %s17, 1
        %s163 = scalar_select %p162, %s17, 1
        %s164 = smul.addr %s163, 8
        %s165 = scalar_lea.vmem %s0, %s164
        %v166 = vld [vmem:[%s165] sm:$0xff]
        %v167 = vld [vmem:[%s1] sm:$0xff]
        %v168 = vld [vmem:[%s1 + $0x8] sm:$0xff]
        %v169 = vld [vmem:[%s1 + $0x10] sm:$0xff]
        %v170 = vld [vmem:[%s1 + $0x18] sm:$0xff]
        %vm171 = vcmask 261120
        %v173 = vsel %vm171, %v166, 0
        %175 = vmatpush.msra.mxu0 0.0
        %176 = vmatpush.msra.mxu0 0.0
        %177 = vmatpush.msra.mxu0 0.0
        %178 = vmatpush.msra.mxu0 0.0
        %179 = vmatpush.msra.mxu0 0.0
        %180 = vmatpush.msra.mxu0 0.0
        %181 = vmatpush.msra.mxu0 0.0
        %182 = vmatpush.msra.mxu0 0.0
        %183 = vmatpush.msra.mxu0 0.0
        %184 = vmatpush.msra.mxu0 0.0
        %185 = vmatpush.msra.mxu0 0.0
        %186 = vmatpush.msra.mxu0 0.0
        %187 = vmatpush.msra.mxu0 %v170
        %188 = vmatpush.msra.mxu0 %v169
        %189 = vmatpush.msra.mxu0 %v168
        %190 = vmatpush.msra.mxu0 %v167
        %191 = vmatmul.f32.gmra.mxu0 %v173
        %v192 = vpop.f32.mrf.mxu0
        %v193 = vadd.f32 0.0, %v192
        %194 = vdwg.mxu0
        %v195 = vmul.f32 %v193, 0.5
        %v196 = vmul.f32 %v193, 0.044715
        %v197 = vmul.f32 %v196, %v193
        %v198 = vmul.f32 %v197, %v193
        %v199 = vadd.f32 %v193, %v198
        %v200 = vmul.f32 %v199, 0.7978846
        %v201 = vtanh.pop %v200
        %v202 = vadd.f32 %v201, 1.0
        %v203 = vmul.f32 %v195, %v202
        %v204 = vld [vmem:[%s2] sm:$0xff]
        %v205 = vld [vmem:[%s2 + $0x8] sm:$0xff]
        %v206 = vld [vmem:[%s2 + $0x10] sm:$0xff]
        %v207 = vld [vmem:[%s2 + $0x18] sm:$0xff]
        %v208 = vld [vmem:[%s2 + $0x20] sm:$0xff]
        %v209 = vld [vmem:[%s2 + $0x28] sm:$0xff]
        %v210 = vld [vmem:[%s2 + $0x30] sm:$0xff]
        %v211 = vld [vmem:[%s2 + $0x38] sm:$0xff]
        %v212 = vld [vmem:[%s2 + $0x40] sm:$0xff]
        %v213 = vld [vmem:[%s2 + $0x48] sm:$0xff]
        %v214 = vld [vmem:[%s2 + $0x50] sm:$0xff]
        %v215 = vld [vmem:[%s2 + $0x58] sm:$0xff]
        %v216 = vld [vmem:[%s2 + $0x60] sm:$0xff]
        %v217 = vld [vmem:[%s2 + $0x68] sm:$0xff]
        %v218 = vld [vmem:[%s2 + $0x70] sm:$0xff]
        %v219 = vld [vmem:[%s2 + $0x78] sm:$0xff]
        %220 = vmatpush.msra.mxu0 %v219
        %221 = vmatpush.msra.mxu0 %v218
        %222 = vmatpush.msra.mxu0 %v217
        %223 = vmatpush.msra.mxu0 %v216
        %224 = vmatpush.msra.mxu0 %v215
        %225 = vmatpush.msra.mxu0 %v214
        %226 = vmatpush.msra.mxu0 %v213
        %227 = vmatpush.msra.mxu0 %v212
        %228 = vmatpush.msra.mxu0 %v211
        %229 = vmatpush.msra.mxu0 %v210
        %230 = vmatpush.msra.mxu0 %v209
        %231 = vmatpush.msra.mxu0 %v208
        %232 = vmatpush.msra.mxu0 %v207
        %233 = vmatpush.msra.mxu0 %v206
        %234 = vmatpush.msra.mxu0 %v205
        %235 = vmatpush.msra.mxu0 %v204
        %236 = vmatmul.f32.gmra.mxu0 %v203
        %v237 = vpop.f32.mrf.mxu0
        %v238 = vadd.f32 0.0, %v237
        %239 = vdwg.mxu0
        %240 = vst.msk [vmem:[%s161] sm:$0xff] %vm171, %v238
        %s241 = sand.u32 %s93, 1
        %s242 = scalar_lea.sflag [#allocation3], %s241
        %s243 = sand.u32 %s93, 1
        %s244 = smul.addr %s243, 8
        %s245 = scalar_lea.vmem [#allocation2], %s244
        // Predicated region
        $region33: #{tpu_custom_call.1} parent=31 // pred_check
          %p246 = pneg %p103
        $region34: #{tpu_custom_call.1} parent=31 // pred_check_branch
          %248 = sbr.rel (%p246) target = $region36
        $region35: #{tpu_custom_call.1} parent=31 // pred_region
          %250 = vsyncadd %s242, 0
          %s251 = smul.addr %s17, 8
          %s252 = scalar_lea.hbm %s3, %s251
          %s254 = sshll.u32 %s245, 4
          %s255 = int_to_ptr.vmem [resolvable:$true] %s254
          %s256 = sshll.u32 %s252, 4
          %s257 = int_to_ptr.hbm [resolvable:$true] %s256
          %259 = dma.vmem_to_hbm [thread:$0]  %s255, 128, %s257, %s242
        $region36: #{tpu_custom_call.1} parent=31 // pred_fallthru
          _
      $region32: #{tpu_custom_call.1} parent=5 // pred_fallthru
        _
      %p260 = scmp.le.s32.totalorder 2, %s12
      // Predicated region
      $region37: #{tpu_custom_call.1} parent=5 // pred_check
        %p261 = pneg %p260
      $region38: #{tpu_custom_call.1} parent=5 // pred_check_branch
        %263 = sbr.rel (%p261) target = $region40
      $region39: #{tpu_custom_call.1} parent=5 // pred_region
        %s264 = ssub.s32 %s12, 2
        // Predicated region
        $region41: #{tpu_custom_call.1} parent=39 // pred_check
          %p265 = pneg %p109
        $region42: #{tpu_custom_call.1} parent=39 // pred_check_branch
          %267 = sbr.rel (%p265) target = $region44
        $region43: #{tpu_custom_call.1} parent=39 // pred_region
          %s268 = sand.u32 %s94, 1
          %s269 = scalar_lea.sflag [#allocation3], %s268
          %s270 = sand.u32 %s94, 1
          %s271 = smul.addr %s270, 8
          %s272 = scalar_lea.vmem [#allocation2], %s271
          %274 = dma.done %s269, 128
        $region44: #{tpu_custom_call.1} parent=39 // pred_fallthru
          _
      $region40: #{tpu_custom_call.1} parent=5 // pred_fallthru
        _
    $region6: #{tpu_custom_call.1} parent=1 // loop_footer
      %s16 = sadd.s32 1, %s12
    $region7: #{tpu_custom_call.1} parent=1 // loop_footer_branch
      %11 = sbr.rel target = $region3
    $region8: #{tpu_custom_call.1} parent=1 // loop_exit
      _
    %275 = vsyncpa [#allocation3], 1
    %s276 = scalar_lea.sflag [#allocation3], 1
    %277 = vsyncpa %s276, 1

</llo_original>
